<compile_context>
chip_gen: v7x
topology: tpu7x:2x2x1
jax: 0.10.0
libtpu: 0.0.40
codegen_flags: <defaults>
</compile_context>

<pallas_src>
import math

import jax
import jax.numpy as jnp
import numpy as np
from jax.experimental import pallas as pl
from jax.experimental.pallas import tpu as pltpu


def _mod_demod_kernel(s1_ref, dinv_ref, w_ref, x_ref, o_ref):
    # s1_ref   : (1, C_in)   compute dtype   (style_b + 1)        [b-only fetch]
    # dinv_ref : (1, TN)     f32             rsqrt((s+1)^2 W^2+e) [b,n fetch]
    # w_ref    : (C_in, TN)                  shared weight        [stationary]
    # x_ref    : (TM, C_in)                  row tile of batch b
    # o_ref    : (TM, TN)
    xs = x_ref[...].astype(s1_ref.dtype) * s1_ref[...]          # modulate (lanes = C_in)
    y = jnp.dot(xs.astype(w_ref.dtype), w_ref[...],
                preferred_element_type=jnp.float32)             # MXU
    o_ref[...] = (y * dinv_ref[...]).astype(o_ref.dtype)        # demodulate (lanes = C_out)


def _mod_kernel(s1_ref, w_ref, x_ref, o_ref):
    xs = x_ref[...].astype(s1_ref.dtype) * s1_ref[...]
    y = jnp.dot(xs.astype(w_ref.dtype), w_ref[...],
                preferred_element_type=jnp.float32)
    o_ref[...] = y.astype(o_ref.dtype)


def sin_style_mod_forward(x, style, weight, *, demodulate=True, eps=1e-8,
                          block_rows=None, mxu_dtype=None):
    """Pallas implementation of SinStyleMod.forward (bmm path, no style fc).

    x:      (B, N, C_in) or (B, C_in)
    style:  (B, C_in)
    weight: (C_in, C_out) or the raw PyTorch parameter (1, C_in, C_out)
    mxu_dtype: optional matmul/modulation dtype (e.g. jnp.bfloat16 on v6e/v7x).
               Demodulation vector stays f32.
    """
    if weight.ndim == 3:
        assert weight.shape[0] == 1
        weight = weight[0]
    squeeze = x.ndim == 2
    if squeeze:
        x = x[:, None, :]
    assert x.ndim == 3
    B, N, C_in = x.shape
    C_in_w, C_out = weight.shape
    assert C_in == C_in_w and style.shape == (B, C_in)

    # ---- Output lane padding: only when C_out is large AND nearly a 128 multiple.
    pad = (-C_out) % 128
    do_pad = (pad > 0) and (C_out > 128) and (pad * 8 <= C_out)
    if do_pad:
        C_out_p = C_out + pad
        weight = jnp.pad(weight, ((0, 0), (0, pad)))
    else:
        C_out_p = C_out

    # ---- Wrapper-side precompute (tiny: B*C_in + B*C_out + C_in*C_out elements).
    compute_dtype = jnp.float32 if mxu_dtype is None else mxu_dtype
    s1_f32 = style.astype(jnp.float32) + 1.0                     # (B, C_in)
    s1 = s1_f32.astype(compute_dtype)[:, None, :]                # (B, 1, C_in)
    w_mm = weight if mxu_dtype is None else weight.astype(mxu_dtype)
    dinv = None
    if demodulate:
        w_f32 = weight.astype(jnp.float32)
        d = jnp.dot(s1_f32 * s1_f32, w_f32 * w_f32)              # (B, C_out_p)
        dinv = jax.lax.rsqrt(d + eps)[:, None, :]                # (B, 1, C_out_p) f32

    # ---- Per-generation VMEM budget and tile sizes.
    try:
        info = pltpu.get_tpu_info()
        vmem_cap = int(getattr(info, "vmem_capacity_bytes", 64 * 2 ** 20))
    except Exception:
        vmem_cap = 64 * 2 ** 20                  # conservative (v7x per-TensorCore)
    budget = int(vmem_cap * 3 // 4)              # ~48 MiB on v7x, ~96 MiB on v5e/v6e

    # Optional C_out tile (only when padded width is a large 128-multiple).
    tn = C_out_p
    tn_threshold = 2048 if vmem_cap > (64 << 20) else 1024
    if C_out_p % 128 == 0 and C_out_p > tn_threshold:
        for cand in (2048, 1024, 512, 256, 128):
            if cand <= tn_threshold and C_out_p % cand == 0:
                tn = cand
                break

    x_bytes = jnp.dtype(x.dtype).itemsize
    w_bytes = jnp.dtype(w_mm.dtype).itemsize
    # Size row tiles assuming a double-buffered weight so the fallback path fits too.
    fixed = 2 * C_in * tn * w_bytes + 4 * (C_in + tn) * 4 + (2 << 20)
    per_row = 2 * C_in * x_bytes + 2 * tn * x_bytes
    tm_cap = max(8, (budget - fixed) // per_row)
    tm_cap = min(int(tm_cap), block_rows if block_rows is not None else 4096)
    if N <= tm_cap:
        tm = N                                   # block == full array dim (always legal)
    else:
        tm = max(8, (tm_cap // 8) * 8)

    grid = (C_out_p // tn, B, pl.cdiv(N, tm))
    out_shape = jax.ShapeDtypeStruct((B, N, C_out_p), x.dtype)

    def build_and_call(single_buffer_weight):
        w_kwargs = dict(pipeline_mode=pl.Buffered(1)) if single_buffer_weight else {}
        # Weight: block index constant in (b, t) -> re-DMA'd only per C_out tile.
        w_spec = pl.BlockSpec((C_in, tn), lambda n, b, t: (0, n), **w_kwargs)
        s1_spec = pl.BlockSpec((pl.Squeezed(), 1, C_in), lambda n, b, t: (b, 0, 0))
        x_spec = pl.BlockSpec((pl.Squeezed(), tm, C_in), lambda n, b, t: (b, t, 0))
        o_spec = pl.BlockSpec((pl.Squeezed(), tm, tn), lambda n, b, t: (b, t, n))
        if demodulate:
            dinv_spec = pl.BlockSpec((pl.Squeezed(), 1, tn), lambda n, b, t: (b, 0, n))
            kernel = _mod_demod_kernel
            in_specs = [s1_spec, dinv_spec, w_spec, x_spec]
            args = (s1, dinv, w_mm, x)
        else:
            kernel = _mod_kernel
            in_specs = [s1_spec, w_spec, x_spec]
            args = (s1, w_mm, x)
        return pl.pallas_call(
            kernel,
            out_shape=out_shape,
            grid_spec=pltpu.PrefetchScalarGridSpec(
                num_scalar_prefetch=0,
                grid=grid,
                in_specs=in_specs,
                out_specs=o_spec),
            compiler_params=pltpu.CompilerParams(
                dimension_semantics=("parallel", "parallel", "parallel"),
                vmem_limit_bytes=budget),
        )(*args)

    try:
        out = build_and_call(True)
    except Exception:
        # TODO(synk): pl.Buffered(1) (single-buffered stationary weight) not supported
        # on this JAX/Mosaic build; fall back to default double-buffering.
        out = build_and_call(False)

    if C_out_p != C_out:
        out = out[..., :C_out]
    if squeeze:
        out = out[:, 0, :]
    return out


def _reference(x, style, weight, eps=1e-8, demodulate=True):
    # Pure-JAX reference mirroring PyTorch forward_bmm.
    xin = x[:, None, :] if x.ndim == 2 else x
    w = weight[None, :, :] * (style[:, :, None] + 1.0)           # (B, C_in, C_out)
    if demodulate:
        demod = jax.lax.rsqrt(jnp.sum(w * w, axis=1) + eps)      # (B, C_out)
        w = w * demod[:, None, :]
    out = jnp.einsum("bnc,bco->bno", xin, w)
    if x.ndim == 2:
        out = out[:, 0, :]
    return out


if __name__ == "__main__":
    # Module config: in_channel=32, out_channel=32, kernel_size=1,
    # use_style_fc=False, use_group_conv=False.
    B, N, C_IN, C_OUT = 2, 16, 32, 32

    key = jax.random.PRNGKey(0)
    kx, ks, kw = jax.random.split(key, 3)

    # Deterministic kaiming_normal_(a=0.2, fan_in, leaky_relu) for a (C_in, C_out)
    # 2-D weight (PyTorch fan_in = size(1) = C_OUT).
    gain = math.sqrt(2.0 / (1.0 + 0.2 ** 2))
    std = gain / math.sqrt(C_OUT)
    weight = jax.random.normal(kw, (C_IN, C_OUT), dtype=jnp.float32) * std

    x = jax.random.normal(kx, (B, N, C_IN), dtype=jnp.float32)
    style = jax.random.normal(ks, (B, C_IN), dtype=jnp.float32)

    # demodulate=True (module default), f32 MXU path.
    out = jax.block_until_ready(sin_style_mod_forward(x, style, weight))
    ref = _reference(x, style, weight)
    np.testing.assert_allclose(np.asarray(out), np.asarray(ref), rtol=1e-5, atol=1e-5)

    # demodulate=False branch.
    out_nd = jax.block_until_ready(
        sin_style_mod_forward(x, style, weight, demodulate=False))
    ref_nd = _reference(x, style, weight, demodulate=False)
    np.testing.assert_allclose(np.asarray(out_nd), np.asarray(ref_nd),
                               rtol=1e-5, atol=1e-5)

    # bf16 MXU path (v6e/v7x lever); loose tolerance vs the f32 reference.
    out_bf16 = jax.block_until_ready(
        sin_style_mod_forward(x, style, weight, mxu_dtype=jnp.bfloat16))
    np.testing.assert_allclose(np.asarray(out_bf16), np.asarray(ref),
                               rtol=1e-1, atol=1e-1)

    print("KERNEL_OK")
</pallas_src>

<mosaic_0001>
module attributes {stable_mosaic.version = 11 : i64} {
  func.func @_mod_demod_kernel(%arg0: i32, %arg1: i32, %arg2: i32, %arg3: memref<1x1x32xf32, #tpu.memory_space<vmem>>, %arg4: memref<1x1x32xf32, #tpu.memory_space<vmem>>, %arg5: memref<32x32xf32, #tpu.memory_space<vmem>>, %arg6: memref<1x16x32xf32, #tpu.memory_space<vmem>>, %arg7: memref<1x16x32xf32, #tpu.memory_space<vmem>>) attributes {dimension_semantics = [#tpu.dimension_semantics<parallel>, #tpu.dimension_semantics<parallel>, #tpu.dimension_semantics<parallel>], iteration_bounds = array<i64: 1, 2, 1>, scalar_prefetch = 0 : i64, scratch_operands = 0 : i64, tpu.core_type = #tpu.core_type<tc>, window_params = [{transform_indices = @transform_0, window_bounds = array<i64: 1, 1, 32>}, {transform_indices = @transform_1, window_bounds = array<i64: 1, 1, 32>}, {pipeline_mode = #tpu.pipeline_mode<synchronous>, transform_indices = @transform_2, window_bounds = array<i64: 32, 32>}, {transform_indices = @transform_3, window_bounds = array<i64: 1, 16, 32>}, {transform_indices = @transform_4, window_bounds = array<i64: 1, 16, 32>}]} {
    %c0 = arith.constant 0 : index
    %c0_0 = arith.constant 0 : index
    %c0_1 = arith.constant 0 : index
    %0 = vector.load %arg6[%c0, %c0_0, %c0_1] : memref<1x16x32xf32, #tpu.memory_space<vmem>>, vector<1x16x32xf32>
    %1 = vector.shape_cast %0 : vector<1x16x32xf32> to vector<16x32xf32>
    %c0_2 = arith.constant 0 : index
    %c0_3 = arith.constant 0 : index
    %c0_4 = arith.constant 0 : index
    %2 = vector.load %arg3[%c0_2, %c0_3, %c0_4] : memref<1x1x32xf32, #tpu.memory_space<vmem>>, vector<1x1x32xf32>
    %3 = vector.shape_cast %2 : vector<1x1x32xf32> to vector<1x32xf32>
    %4 = vector.broadcast %3 : vector<1x32xf32> to vector<16x32xf32>
    %5 = arith.mulf %1, %4 : vector<16x32xf32>
    %c0_5 = arith.constant 0 : index
    %c0_6 = arith.constant 0 : index
    %6 = vector.load %arg5[%c0_5, %c0_6] : memref<32x32xf32, #tpu.memory_space<vmem>>, vector<32x32xf32>
    %cst = arith.constant dense<0.000000e+00> : vector<16x32xf32>
    %7 = tpu.matmul %5, %6, %cst {dimension_numbers = #tpu.dot_dimension_numbers<[1], [0], [0], [1], [0, 0, 1, 1], [], []>} : vector<16x32xf32>, vector<32x32xf32>, vector<16x32xf32> -> vector<16x32xf32>
    %c0_7 = arith.constant 0 : index
    %c0_8 = arith.constant 0 : index
    %c0_9 = arith.constant 0 : index
    %8 = vector.load %arg4[%c0_7, %c0_8, %c0_9] : memref<1x1x32xf32, #tpu.memory_space<vmem>>, vector<1x1x32xf32>
    %9 = vector.shape_cast %8 : vector<1x1x32xf32> to vector<1x32xf32>
    %10 = vector.broadcast %9 : vector<1x32xf32> to vector<16x32xf32>
    %11 = arith.mulf %7, %10 : vector<16x32xf32>
    %c0_10 = arith.constant 0 : index
    %c0_11 = arith.constant 0 : index
    %c0_12 = arith.constant 0 : index
    %12 = vector.load %arg7[%c0_10, %c0_11, %c0_12] : memref<1x16x32xf32, #tpu.memory_space<vmem>>, vector<1x16x32xf32>
    %13 = vector.shape_cast %12 : vector<1x16x32xf32> to vector<16x32xf32>
    %14 = vector.shape_cast %11 : vector<16x32xf32> to vector<1x16x32xf32>
    tpu.vector_store %arg7[%c0_10, %c0_11, %c0_12], %14 {strides = array<i32>} : memref<1x16x32xf32, #tpu.memory_space<vmem>>, vector<1x16x32xf32>,
    return
  }
  func.func @transform_0(%arg0: i32, %arg1: i32, %arg2: i32) -> (i32, i32, i32) {
    %c0_i32 = arith.constant 0 : i32
    %c0_i32_0 = arith.constant 0 : i32
    %c0_i32_1 = arith.constant 0 : i32
    return %arg1, %c0_i32, %c0_i32_0 : i32, i32, i32
  }
  func.func @transform_1(%arg0: i32, %arg1: i32, %arg2: i32) -> (i32, i32, i32) {
    %c0_i32 = arith.constant 0 : i32
    %c0_i32_0 = arith.constant 0 : i32
    return %arg1, %c0_i32, %arg0 : i32, i32, i32
  }
  func.func @transform_2(%arg0: i32, %arg1: i32, %arg2: i32) -> (i32, i32) {
    %c0_i32 = arith.constant 0 : i32
    %c0_i32_0 = arith.constant 0 : i32
    return %c0_i32, %arg0 : i32, i32
  }
  func.func @transform_3(%arg0: i32, %arg1: i32, %arg2: i32) -> (i32, i32, i32) {
    %c0_i32 = arith.constant 0 : i32
    %c0_i32_0 = arith.constant 0 : i32
    return %arg1, %arg2, %c0_i32 : i32, i32, i32
  }
  func.func @transform_4(%arg0: i32, %arg1: i32, %arg2: i32) -> (i32, i32, i32) {
    %c0_i32 = arith.constant 0 : i32
    return %arg1, %arg2, %arg0 : i32, i32, i32
  }
}

module attributes {stable_mosaic.version = 11 : i64} {
  func.func @_mod_demod_kernel(%arg0: i32, %arg1: i32, %arg2: i32, %arg3: memref<1x1x32xf32, #tpu.memory_space<vmem>>, %arg4: memref<1x1x32xf32, #tpu.memory_space<vmem>>, %arg5: memref<32x32xf32, #tpu.memory_space<vmem>>, %arg6: memref<1x16x32xf32, #tpu.memory_space<vmem>>, %arg7: memref<1x16x32xf32, #tpu.memory_space<vmem>>) attributes {dimension_semantics = [#tpu.dimension_semantics<parallel>, #tpu.dimension_semantics<parallel>, #tpu.dimension_semantics<parallel>], iteration_bounds = array<i64: 1, 2, 1>, scalar_prefetch = 0 : i64, scratch_operands = 0 : i64, tpu.core_type = #tpu.core_type<tc>, window_params = [{transform_indices = @transform_0, window_bounds = array<i64: 1, 1, 32>}, {transform_indices = @transform_1, window_bounds = array<i64: 1, 1, 32>}, {transform_indices = @transform_2, window_bounds = array<i64: 32, 32>}, {transform_indices = @transform_3, window_bounds = array<i64: 1, 16, 32>}, {transform_indices = @transform_4, window_bounds = array<i64: 1, 16, 32>}]} {
    %c0 = arith.constant 0 : index
    %c0_0 = arith.constant 0 : index
    %c0_1 = arith.constant 0 : index
    %0 = vector.load %arg6[%c0, %c0_0, %c0_1] : memref<1x16x32xf32, #tpu.memory_space<vmem>>, vector<1x16x32xf32>
    %1 = vector.shape_cast %0 : vector<1x16x32xf32> to vector<16x32xf32>
    %c0_2 = arith.constant 0 : index
    %c0_3 = arith.constant 0 : index
    %c0_4 = arith.constant 0 : index
    %2 = vector.load %arg3[%c0_2, %c0_3, %c0_4] : memref<1x1x32xf32, #tpu.memory_space<vmem>>, vector<1x1x32xf32>
    %3 = vector.shape_cast %2 : vector<1x1x32xf32> to vector<1x32xf32>
    %4 = vector.broadcast %3 : vector<1x32xf32> to vector<16x32xf32>
    %5 = arith.mulf %1, %4 : vector<16x32xf32>
    %c0_5 = arith.constant 0 : index
    %c0_6 = arith.constant 0 : index
    %6 = vector.load %arg5[%c0_5, %c0_6] : memref<32x32xf32, #tpu.memory_space<vmem>>, vector<32x32xf32>
    %cst = arith.constant dense<0.000000e+00> : vector<16x32xf32>
    %7 = tpu.matmul %5, %6, %cst {dimension_numbers = #tpu.dot_dimension_numbers<[1], [0], [0], [1], [0, 0, 1, 1], [], []>} : vector<16x32xf32>, vector<32x32xf32>, vector<16x32xf32> -> vector<16x32xf32>
    %c0_7 = arith.constant 0 : index
    %c0_8 = arith.constant 0 : index
    %c0_9 = arith.constant 0 : index
    %8 = vector.load %arg4[%c0_7, %c0_8, %c0_9] : memref<1x1x32xf32, #tpu.memory_space<vmem>>, vector<1x1x32xf32>
    %9 = vector.shape_cast %8 : vector<1x1x32xf32> to vector<1x32xf32>
    %10 = vector.broadcast %9 : vector<1x32xf32> to vector<16x32xf32>
    %11 = arith.mulf %7, %10 : vector<16x32xf32>
    %c0_10 = arith.constant 0 : index
    %c0_11 = arith.constant 0 : index
    %c0_12 = arith.constant 0 : index
    %12 = vector.load %arg7[%c0_10, %c0_11, %c0_12] : memref<1x16x32xf32, #tpu.memory_space<vmem>>, vector<1x16x32xf32>
    %13 = vector.shape_cast %12 : vector<1x16x32xf32> to vector<16x32xf32>
    %14 = vector.shape_cast %11 : vector<16x32xf32> to vector<1x16x32xf32>
    tpu.vector_store %arg7[%c0_10, %c0_11, %c0_12], %14 {strides = array<i32>} : memref<1x16x32xf32, #tpu.memory_space<vmem>>, vector<1x16x32xf32>,
    return
  }
  func.func @transform_0(%arg0: i32, %arg1: i32, %arg2: i32) -> (i32, i32, i32) {
    %c0_i32 = arith.constant 0 : i32
    %c0_i32_0 = arith.constant 0 : i32
    %c0_i32_1 = arith.constant 0 : i32
    return %arg1, %c0_i32, %c0_i32_0 : i32, i32, i32
  }
  func.func @transform_1(%arg0: i32, %arg1: i32, %arg2: i32) -> (i32, i32, i32) {
    %c0_i32 = arith.constant 0 : i32
    %c0_i32_0 = arith.constant 0 : i32
    return %arg1, %c0_i32, %arg0 : i32, i32, i32
  }
  func.func @transform_2(%arg0: i32, %arg1: i32, %arg2: i32) -> (i32, i32) {
    %c0_i32 = arith.constant 0 : i32
    %c0_i32_0 = arith.constant 0 : i32
    return %c0_i32, %arg0 : i32, i32
  }
  func.func @transform_3(%arg0: i32, %arg1: i32, %arg2: i32) -> (i32, i32, i32) {
    %c0_i32 = arith.constant 0 : i32
    %c0_i32_0 = arith.constant 0 : i32
    return %arg1, %arg2, %c0_i32 : i32, i32, i32
  }
  func.func @transform_4(%arg0: i32, %arg1: i32, %arg2: i32) -> (i32, i32, i32) {
    %c0_i32 = arith.constant 0 : i32
    return %arg1, %arg2, %arg0 : i32, i32, i32
  }
}

</mosaic_0001>

<llo_original>
// kernel: tpu_custom_call.1
$region0: #{tpu_custom_call.1}
  #allocation0 [shape = 'u32[]', space=smem, size = 0x4, offset = 0x4, fixed_abs, tag = 'smem constant byte address 0x4 - core index']
  #allocation1 [shape = 'u32[144,128]{1,0:T(1,128)}', space=vmem, size = 0x12000, scoped, tag = 'internal scratch']
  %s0 = inlined_call_operand.hbm [shape: f32[2,1,32], index: 0, kind: input, shape index: {}]
  %s1 = inlined_call_operand.vmem [shape: f32[2,1,32], index: 1, kind: input, shape index: {}]
  %s2 = inlined_call_operand.hbm [shape: f32[32,32], index: 2, kind: input, shape index: {}]
  %s3 = inlined_call_operand.hbm [shape: f32[2,16,32], index: 3, kind: input, shape index: {}]
  %s4 = inlined_call_operand.hbm [shape: f32[2,16,32], index: 4, kind: output, shape index: {}]
  %s5 = sld [smem:[#allocation0]]
  $region61: #{tpu_custom_call.1} parent=0
    _
  %s7 = ssub.s32 1, %s5
  %s8 = scalar_select 0, %s7, %s5
  $region1: #{tpu_custom_call.1} parent=0
    #allocation2 [shape = 'u8[1024]{0}', space=vmem, size = 0x400, scoped, tag = 'input window, operand 0']
    #allocation3 [shape = 's32[2]{0}', space=sflag, size = 0x8, scoped, tag = 'scoped memory for tpu_custom_call.1']
    #allocation4 [shape = 's32[2]{0}', space=sflag, size = 0x8, scoped, tag = 'scoped memory for tpu_custom_call.1']
    #allocation5 [shape = 'u8[16384]{0}', space=vmem, size = 0x4000, scoped, tag = 'input window, operand 2, single buffered']
    #allocation6 [shape = 's32[1]{0}', space=sflag, size = 0x4, scoped, tag = 'scoped memory for tpu_custom_call.1']
    #allocation7 [shape = 'u8[16384]{0}', space=vmem, size = 0x4000, scoped, tag = 'input window, operand 3']
    #allocation8 [shape = 'u8[16384]{0}', space=vmem, size = 0x4000, scoped, tag = 'output window, operand 0']
    %9 = vsyncpa [#allocation3], 0
    %s10 = scalar_lea.sflag [#allocation3], 1
    %11 = vsyncpa %s10, 0
    %12 = vsyncpa [#allocation6], 0
    %13 = vsyncpa [#allocation4], 0
    %s14 = scalar_lea.sflag [#allocation4], 1
    %15 = vsyncpa %s14, 0
    loop: start=0, step=1, limit=4
    $region2: #{tpu_custom_call.1} parent=1 // loop_pre_header
      _
    $region3: #{tpu_custom_call.1} parent=1 // loop_header
      %s17 = sphi 0, %s21
      %p18 = scmp.ge.s32.totalorder %s17, 4
      %s24 = sphi 0, %s43
      %s25 = sphi 0, %s39
      %s26 = sphi 0, %s35
      %s27 = sphi 0, %s24
      %s28 = sphi 0, %s25
      %s29 = sphi 0, %s26
      %s30 = sphi 0, %s27
      %s31 = sphi 0, %s28
      %s32 = sphi 0, %s29
      %s46 = sphi 0, %s48
      %s49 = sphi 0, %s46
      %s50 = sphi 0, %s49
      %s66 = sphi 0, %s50
      %s74 = sphi 0, %s76
      %s77 = sphi 0, %s74
      %s78 = sphi 0, %s77
      %s94 = sphi 0, %s78
      %s100 = sphi 0, %s102
      %s103 = sphi 0, %s100
      %s104 = sphi 0, %s103
      %s120 = sphi 0, %s104
      %s128 = sphi 0, %s130
      %s131 = sphi 0, %s128
      %s132 = sphi 0, %s131
      %s148 = sphi 0, %s132
      %s158 = sphi 0, %s160
      %s161 = sphi 0, %s158
      %s162 = sphi 0, %s161
      %s178 = sphi 0, %s162
    $region4: #{tpu_custom_call.1} parent=1 // loop_header_branch
      %20 = sbr.rel (%p18) target = $region8
    $region5: #{tpu_custom_call.1} parent=1 // loop_body
      %s22 = ssub.s32 %s17, 1
      %s23 = ssub.s32 %s17, 2
      %s33 = sadd.s32 1, %s26
      %p34 = scmp.ge.s32.totalorder %s33, 1
      %s35 = scalar_select %p34, 0, %s33
      %s36 = sadd.s32 1, %s25
      %s37 = scalar_select %p34, %s36, %s25
      %p38 = scmp.ge.s32.totalorder %s37, 2
      %s39 = scalar_select %p38, 0, %s37
      %s40 = sadd.s32 1, %s24
      %s41 = scalar_select %p38, %s40, %s24
      %p42 = scmp.ge.s32.totalorder %s41, 1
      %s43 = scalar_select %p42, 0, %s41
      %s44 = ssub.s32 %s25, %s39
      %p45 = scmp.eq.s32.totalorder %s44, 0
      %s47 = sadd.s32 %s46, 1
      %s48 = scalar_select %p45, %s46, %s47
      %p51 = pneg %p45
      %p52 = scmp.eq.s32.totalorder %s17, 1
      %p53 = por %p51, %p52
      %p54 = scmp.ne.s32.totalorder %s46, %s49
      %p55 = scmp.eq.s32.totalorder %s17, 0
      %p56 = por %p54, %p55
      %p57 = scmp.ne.s32.totalorder %s46, %s49
      %p58 = scmp.eq.s32.totalorder %s22, 1
      %p59 = por %p57, %p58
      %p60 = scmp.ne.s32.totalorder %s49, %s50
      %p61 = scmp.eq.s32.totalorder %s22, 0
      %p62 = por %p60, %p61
      %p63 = scmp.ne.s32.totalorder %s49, %s50
      %p64 = scmp.eq.s32.totalorder %s23, 1
      %p65 = por %p63, %p64
      %p67 = scmp.ne.s32.totalorder %s50, %s66
      %p68 = scmp.eq.s32.totalorder %s23, 0
      %p69 = por %p67, %p68
      %s70 = ssub.s32 %s25, %s39
      %s71 = ssub.s32 %s24, %s43
      %s72 = sor.u32 %s70, %s71
      %p73 = scmp.eq.s32.totalorder %s72, 0
      %s75 = sadd.s32 %s74, 1
      %s76 = scalar_select %p73, %s74, %s75
      %p79 = pneg %p73
      %p80 = scmp.eq.s32.totalorder %s17, 1
      %p81 = por %p79, %p80
      %p82 = scmp.ne.s32.totalorder %s74, %s77
      %p83 = scmp.eq.s32.totalorder %s17, 0
      %p84 = por %p82, %p83
      %p85 = scmp.ne.s32.totalorder %s74, %s77
      %p86 = scmp.eq.s32.totalorder %s22, 1
      %p87 = por %p85, %p86
      %p88 = scmp.ne.s32.totalorder %s77, %s78
      %p89 = scmp.eq.s32.totalorder %s22, 0
      %p90 = por %p88, %p89
      %p91 = scmp.ne.s32.totalorder %s77, %s78
      %p92 = scmp.eq.s32.totalorder %s23, 1
      %p93 = por %p91, %p92
      %p95 = scmp.ne.s32.totalorder %s78, %s94
      %p96 = scmp.eq.s32.totalorder %s23, 0
      %p97 = por %p95, %p96
      %s98 = ssub.s32 %s24, %s43
      %p99 = scmp.eq.s32.totalorder %s98, 0
      %s101 = sadd.s32 %s100, 1
      %s102 = scalar_select %p99, %s100, %s101
      %p105 = pneg %p99
      %p106 = scmp.eq.s32.totalorder %s17, 1
      %p107 = por %p105, %p106
      %p108 = scmp.ne.s32.totalorder %s100, %s103
      %p109 = scmp.eq.s32.totalorder %s17, 0
      %p110 = por %p108, %p109
      %p111 = scmp.ne.s32.totalorder %s100, %s103
      %p112 = scmp.eq.s32.totalorder %s22, 1
      %p113 = por %p111, %p112
      %p114 = scmp.ne.s32.totalorder %s103, %s104
      %p115 = scmp.eq.s32.totalorder %s22, 0
      %p116 = por %p114, %p115
      %p117 = scmp.ne.s32.totalorder %s103, %s104
      %p118 = scmp.eq.s32.totalorder %s23, 1
      %p119 = por %p117, %p118
      %p121 = scmp.ne.s32.totalorder %s104, %s120
      %p122 = scmp.eq.s32.totalorder %s23, 0
      %p123 = por %p121, %p122
      %s124 = ssub.s32 %s25, %s39
      %s125 = ssub.s32 %s26, %s35
      %s126 = sor.u32 %s124, %s125
      %p127 = scmp.eq.s32.totalorder %s126, 0
      %s129 = sadd.s32 %s128, 1
      %s130 = scalar_select %p127, %s128, %s129
      %p133 = pneg %p127
      %p134 = scmp.eq.s32.totalorder %s17, 1
      %p135 = por %p133, %p134
      %p136 = scmp.ne.s32.totalorder %s128, %s131
      %p137 = scmp.eq.s32.totalorder %s17, 0
      %p138 = por %p136, %p137
      %p139 = scmp.ne.s32.totalorder %s128, %s131
      %p140 = scmp.eq.s32.totalorder %s22, 1
      %p141 = por %p139, %p140
      %p142 = scmp.ne.s32.totalorder %s131, %s132
      %p143 = scmp.eq.s32.totalorder %s22, 0
      %p144 = por %p142, %p143
      %p145 = scmp.ne.s32.totalorder %s131, %s132
      %p146 = scmp.eq.s32.totalorder %s23, 1
      %p147 = por %p145, %p146
      %p149 = scmp.ne.s32.totalorder %s132, %s148
      %p150 = scmp.eq.s32.totalorder %s23, 0
      %p151 = por %p149, %p150
      %s152 = ssub.s32 %s25, %s39
      %s153 = ssub.s32 %s26, %s35
      %s154 = sor.u32 %s152, %s153
      %s155 = ssub.s32 %s24, %s43
      %s156 = sor.u32 %s154, %s155
      %p157 = scmp.eq.s32.totalorder %s156, 0
      %s159 = sadd.s32 %s158, 1
      %s160 = scalar_select %p157, %s158, %s159
      %p163 = pneg %p157
      %p164 = scmp.eq.s32.totalorder %s17, 1
      %p165 = por %p163, %p164
      %p166 = scmp.ne.s32.totalorder %s158, %s161
      %p167 = scmp.eq.s32.totalorder %s17, 0
      %p168 = por %p166, %p167
      %p169 = scmp.ne.s32.totalorder %s158, %s161
      %p170 = scmp.eq.s32.totalorder %s22, 1
      %p171 = por %p169, %p170
      %p172 = scmp.ne.s32.totalorder %s161, %s162
      %p173 = scmp.eq.s32.totalorder %s22, 0
      %p174 = por %p172, %p173
      %p175 = scmp.ne.s32.totalorder %s161, %s162
      %p176 = scmp.eq.s32.totalorder %s23, 1
      %p177 = por %p175, %p176
      %p179 = scmp.ne.s32.totalorder %s162, %s178
      %p180 = scmp.eq.s32.totalorder %s23, 0
      %p181 = por %p179, %p180
      %p182 = scmp.le.s32.totalorder 1, %s17
      %p183 = scmp.lt.s32.totalorder %s17, 3
      %p184 = pnand %p182, %p183
      %p185 = pneg %p184
      // Predicated region
      $region9: #{tpu_custom_call.1} parent=5 // pred_check
        _
      $region10: #{tpu_custom_call.1} parent=5 // pred_check_branch
        %187 = sbr.rel (%p184) target = $region12
      $region11: #{tpu_custom_call.1} parent=5 // pred_region
        %s188 = ssub.s32 %s17, 1
        // Predicated region
        $region13: #{tpu_custom_call.1} parent=11 // pred_check
          %p189 = pneg %p116
        $region14: #{tpu_custom_call.1} parent=11 // pred_check_branch
          %191 = sbr.rel (%p189) target = $region16
        $region15: #{tpu_custom_call.1} parent=11 // pred_region
          %s193 = ssub.s32 512, 512
          %194 = vsyncadd [#allocation6], %s193
          %s195 = smul.addr %s27, 128
          %s196 = scalar_lea.hbm %s2, %s195
          %s197 = sshll.u32 [#allocation5], 4
          %s198 = int_to_ptr.vmem [resolvable:$true] %s197
          %203 = dma.hbm_to_vmem [thread:$0]  %s196, 512, %s198, [#allocation6], 128, 128, 8
        $region16: #{tpu_custom_call.1} parent=11 // pred_fallthru
          _
      $region12: #{tpu_custom_call.1} parent=5 // pred_fallthru
        _
      %p204 = scmp.lt.s32.totalorder %s17, 2
      // Predicated region
      $region17: #{tpu_custom_call.1} parent=5 // pred_check
        %p205 = pneg %p204
      $region18: #{tpu_custom_call.1} parent=5 // pred_check_branch
        %207 = sbr.rel (%p205) target = $region20
      $region19: #{tpu_custom_call.1} parent=5 // pred_region
        // Predicated region
        $region21: #{tpu_custom_call.1} parent=19 // pred_check
          %p208 = pneg %p56
        $region22: #{tpu_custom_call.1} parent=19 // pred_check_branch
          %210 = sbr.rel (%p208) target = $region24
        $region23: #{tpu_custom_call.1} parent=19 // pred_region
          %s211 = sand.u32 %s17, 1
          %s212 = scalar_lea.sflag [#allocation3], %s211
          %s213 = sand.u32 %s46, 1
          %s214 = scalar_lea.vmem [#allocation2], %s213
          %s216 = ssub.s32 16, 16
          %217 = vsyncadd %s212, %s216
          %s218 = smul.addr %s25, 16
          %s219 = scalar_lea.hbm %s0, %s218
          %s221 = sshll.u32 %s214, 4
          %s222 = int_to_ptr.vmem [resolvable:$true] %s221
          %224 = dma.hbm_to_vmem [thread:$0]  %s219, 16, %s222, %s212
        $region24: #{tpu_custom_call.1} parent=19 // pred_fallthru
          _
        // Predicated region
        $region25: #{tpu_custom_call.1} parent=19 // pred_check
          %p225 = pneg %p84
        $region26: #{tpu_custom_call.1} parent=19 // pred_check_branch
          %227 = sbr.rel (%p225) target = $region28
        $region27: #{tpu_custom_call.1} parent=19 // pred_region
          %p228 = scmp.lt.s32.totalorder %s25, 1
          %s229 = scalar_select %p228, %s25, 1
          %p230 = scmp.lt.s32.totalorder %s24, 0
          %s231 = scalar_select %p230, %s24, 0
          %s232 = sadd.s32 %s231, %s229
          %s233 = scalar_lea.vmem %s1, %s232
        $region28: #{tpu_custom_call.1} parent=19 // pred_fallthru
          _
        // Predicated region
        $region29: #{tpu_custom_call.1} parent=19 // pred_check
          %p234 = pneg %p138
        $region30: #{tpu_custom_call.1} parent=19 // pred_check_branch
          %236 = sbr.rel (%p234) target = $region32
        $region31: #{tpu_custom_call.1} parent=19 // pred_region
          %s237 = sand.u32 %s17, 1
          %s238 = scalar_lea.sflag [#allocation3], %s237
          %s239 = sand.u32 %s128, 1
          %s240 = smul.addr %s239, 16
          %s241 = scalar_lea.vmem [#allocation7], %s240
          %s242 = smul.u32 2, %s26
          %s244 = ssub.s32 256, 256
          %245 = vsyncadd %s238, %s244
          %s246 = smul.addr %s25, 2
          %s247 = sadd.s32 %s242, %s246
          %s248 = smul.addr %s247, 128
          %s249 = scalar_lea.hbm %s3, %s248
          %s250 = sshll.u32 %s241, 4
          %s251 = int_to_ptr.vmem [resolvable:$true] %s250
          %256 = dma.hbm_to_vmem [thread:$0]  %s249, 256, %s251, %s238, 128, 128, 8
        $region32: #{tpu_custom_call.1} parent=19 // pred_fallthru
          _
      $region20: #{tpu_custom_call.1} parent=5 // pred_fallthru
        _
      %p257 = scmp.le.s32.totalorder 1, %s17
      %p258 = scmp.lt.s32.totalorder %s17, 3
      %p259 = pnand %p257, %p258
      %p260 = pneg %p259
      // Predicated region
      $region33: #{tpu_custom_call.1} parent=5 // pred_check
        _
      $region34: #{tpu_custom_call.1} parent=5 // pred_check_branch
        %262 = sbr.rel (%p259) target = $region36
      $region35: #{tpu_custom_call.1} parent=5 // pred_region
        %s263 = ssub.s32 %s17, 1
        %s264 = sand.u32 %s22, 1
        %s265 = scalar_lea.sflag [#allocation3], %s264
        %s266 = sand.u32 %s49, 1
        %s267 = scalar_lea.vmem [#allocation2], %s266
        // Predicated region
        $region37: #{tpu_custom_call.1} parent=35 // pred_check
          %p268 = pneg %p62
        $region38: #{tpu_custom_call.1} parent=35 // pred_check_branch
          %270 = sbr.rel (%p268) target = $region40
        $region39: #{tpu_custom_call.1} parent=35 // pred_region
          %271 = dma.done %s265, 16
        $region40: #{tpu_custom_call.1} parent=35 // pred_fallthru
          _
        // Predicated region
        $region41: #{tpu_custom_call.1} parent=35 // pred_check
          %p272 = pneg %p116
        $region42: #{tpu_custom_call.1} parent=35 // pred_check_branch
          %274 = sbr.rel (%p272) target = $region44
        $region43: #{tpu_custom_call.1} parent=35 // pred_region
          %275 = dma.done [#allocation6], 512
        $region44: #{tpu_custom_call.1} parent=35 // pred_fallthru
          _
        %s276 = sand.u32 %s22, 1
        %s277 = scalar_lea.sflag [#allocation3], %s276
        %s278 = sand.u32 %s131, 1
        %s279 = smul.addr %s278, 16
        %s280 = scalar_lea.vmem [#allocation7], %s279
        // Predicated region
        $region45: #{tpu_custom_call.1} parent=35 // pred_check
          %p281 = pneg %p144
        $region46: #{tpu_custom_call.1} parent=35 // pred_check_branch
          %283 = sbr.rel (%p281) target = $region48
        $region47: #{tpu_custom_call.1} parent=35 // pred_region
          %284 = dma.done %s277, 256
        $region48: #{tpu_custom_call.1} parent=35 // pred_fallthru
          _
        %s285 = sand.u32 %s22, 1
        %s286 = scalar_lea.sflag [#allocation3], %s285
        %s287 = sand.u32 %s49, 1
        %s288 = scalar_lea.vmem [#allocation2], %s287
        %p289 = pneg %p62
        %p290 = pneg %p59
        %p291 = scmp.lt.s32.totalorder %s28, 1
        %s292 = scalar_select %p291, %s28, 1
        %p293 = scmp.lt.s32.totalorder %s27, 0
        %s294 = scalar_select %p293, %s27, 0
        %s295 = sadd.s32 %s294, %s292
        %s296 = scalar_lea.vmem %s1, %s295
        %p297 = pneg %p90
        %p298 = pneg %p87
        %p299 = pneg %p116
        %p300 = pneg %p113
        %s301 = sand.u32 %s22, 1
        %s302 = scalar_lea.sflag [#allocation3], %s301
        %s303 = sand.u32 %s131, 1
        %s304 = smul.addr %s303, 16
        %s305 = scalar_lea.vmem [#allocation7], %s304
        %p306 = pneg %p144
        %p307 = pneg %p141
        %p308 = pneg %p174
        %p309 = pneg %p171
        %s310 = sand.u32 %s161, 1
        %s311 = scalar_lea.sflag [#allocation4], %s310
        %s312 = sand.u32 %s161, 1
        %s313 = smul.addr %s312, 16
        %s314 = scalar_lea.vmem [#allocation8], %s313
        %p315 = scmp.lt.s32.totalorder %s28, 1
        %s316 = scalar_select %p315, %s28, 1
        %p317 = scmp.lt.s32.totalorder %s27, 0
        %s318 = scalar_select %p317, %s27, 0
        %s319 = sadd.s32 %s318, %s316
        %s320 = scalar_lea.vmem %s1, %s319
        %s321 = smul.u32 2, %s29
        %s322 = smul.u32 2, %s29
        %v323 = vld [vmem:[%s280] sm:$0xff]
        %v324 = vld [vmem:[%s280 + $0x8] sm:$0xff]
        %v325 = vld [vmem:[%s267] sm:$0x1]
        %v327 = vlaneseq
        %v328 = vshrl.u32 %v327, 7
        %v329 = vsub.s32 0, %v328
        %v330 = vrot.slane %v325, %v329
        %v332 = vmul.f32 %v323, %v330
        %v333 = vmul.f32 %v324, %v330
        %v334 = vld [vmem:[#allocation5] sm:$0xff]
        %v335 = vld [vmem:[#allocation5 + $0x8] sm:$0xff]
        %v336 = vld [vmem:[#allocation5 + $0x10] sm:$0xff]
        %v337 = vld [vmem:[#allocation5 + $0x18] sm:$0xff]
        %vm338 = vcmask 261120
        %v340 = vsel %vm338, %v332, 0
        %v343 = vsel %vm338, %v333, 0
        %345 = vmatprep.subr.mxu0 0.0
        %346 = vmatpush1.msra.mxu0 %v334
        %347 = vmatprep.subr.mxu0 0.0
        %348 = vmatpush1.msra.mxu0 %v335
        %349 = vmatprep.subr.mxu0 0.0
        %350 = vmatpush1.msra.mxu0 %v336
        %351 = vmatprep.subr.mxu0 0.0
        %352 = vmatpush1.msra.mxu0 %v337
        %353 = vmatprep.subr.mxu0 0.0
        %354 = vmatpush1.msra.mxu0 0.0
        %355 = vmatprep.subr.mxu0 0.0
        %356 = vmatpush1.msra.mxu0 0.0
        %357 = vmatprep.subr.mxu0 0.0
        %358 = vmatpush1.msra.mxu0 0.0
        %359 = vmatprep.subr.mxu0 0.0
        %360 = vmatpush1.msra.mxu0 0.0
        %361 = vmatprep.subr.mxu0 0.0
        %362 = vmatpush1.msra.mxu0 0.0
        %363 = vmatprep.subr.mxu0 0.0
        %364 = vmatpush1.msra.mxu0 0.0
        %365 = vmatprep.subr.mxu0 0.0
        %366 = vmatpush1.msra.mxu0 0.0
        %367 = vmatprep.subr.mxu0 0.0
        %368 = vmatpush1.msra.mxu0 0.0
        %369 = vmatprep.subr.mxu0 0.0
        %370 = vmatpush1.msra.mxu0 0.0
        %371 = vmatprep.subr.mxu0 0.0
        %372 = vmatpush1.msra.mxu0 0.0
        %373 = vmatprep.subr.mxu0 0.0
        %374 = vmatpush1.msra.mxu0 0.0
        %375 = vmatprep.subr.mxu0 0.0
        %376 = vmatpush1.msra.mxu0 0.0
        %377 = vmatprep.subr.mxu0 0.0
        %378 = vmatpush1.msra.mxu0 0.0
        %379 = vmatprep.subr.mxu0 0.0
        %380 = vmatpush1.msra.mxu0 0.0
        %381 = vmatprep.subr.mxu0 0.0
        %382 = vmatpush1.msra.mxu0 0.0
        %383 = vmatprep.subr.mxu0 0.0
        %384 = vmatpush1.msra.mxu0 0.0
        %385 = vmatprep.subr.mxu0 0.0
        %386 = vmatpush1.msra.mxu0 0.0
        %387 = vmatprep.subr.mxu0 0.0
        %388 = vmatpush1.msra.mxu0 0.0
        %389 = vmatprep.subr.mxu0 0.0
        %390 = vmatpush1.msra.mxu0 0.0
        %391 = vmatprep.subr.mxu0 0.0
        %392 = vmatpush1.msra.mxu0 0.0
        %393 = vmatprep.subr.mxu0 0.0
        %394 = vmatpush1.msra.mxu0 0.0
        %395 = vmatprep.subr.mxu0 0.0
        %396 = vmatpush1.msra.mxu0 0.0
        %397 = vmatprep.subr.mxu0 0.0
        %398 = vmatpush1.msra.mxu0 0.0
        %399 = vmatprep.subr.mxu0 0.0
        %400 = vmatpush1.msra.mxu0 0.0
        %401 = vmatprep.subr.mxu0 0.0
        %402 = vmatpush1.msra.mxu0 0.0
        %403 = vmatprep.subr.mxu0 0.0
        %404 = vmatpush1.msra.mxu0 0.0
        %405 = vmatprep.subr.mxu0 0.0
        %406 = vmatpush1.msra.mxu0 0.0
        %407 = vmatprep.subr.mxu0 0.0
        %408 = vmatpush1.msra.mxu0 0.0
        %409 = vmatprep.mubr.f32.mxu0 0.0
        %410 = vmatmul.mubr.f32.gmra.mrb[0].mxu0 %v340
        %v411 = vpop.f32.mrb[0].mxu0
        %v412 = vadd.f32 0.0, %v411
        %v413 = vpop.f32.mrb[0].mxu0
        %414 = vmatprep.mubr.f32.mxu0 0.0
        %415 = vmatmul.mubr.f32.gmra.mrb[0].mxu0 %v343
        %v416 = vpop.f32.mrb[0].mxu0
        %v417 = vadd.f32 0.0, %v416
        %v418 = vpop.f32.mrb[0].mxu0
        %419 = vdwg.mxu0
        %v420 = vld [vmem:[%s320] sm:$0x1]
        %v422 = vlaneseq
        %v423 = vshrl.u32 %v422, 7
        %v424 = vsub.s32 0, %v423
        %v425 = vrot.slane %v420, %v424
        %v427 = vmul.f32 %v412, %v425
        %v428 = vmul.f32 %v417, %v425
        %429 = vst.msk [vmem:[%s314] sm:$0xff] %vm338, %v427
        %430 = vst.msk [vmem:[%s314 + $0x8] sm:$0xff] %vm338, %v428
        %s431 = sand.u32 %s161, 1
        %s432 = scalar_lea.sflag [#allocation4], %s431
        %s433 = sand.u32 %s161, 1
        %s434 = smul.addr %s433, 16
        %s435 = scalar_lea.vmem [#allocation8], %s434
        // Predicated region
        $region49: #{tpu_custom_call.1} parent=35 // pred_check
          %p436 = pneg %p171
        $region50: #{tpu_custom_call.1} parent=35 // pred_check_branch
          %438 = sbr.rel (%p436) target = $region52
        $region51: #{tpu_custom_call.1} parent=35 // pred_region
          %s439 = smul.u32 2, %s29
          %s441 = ssub.s32 256, 256
          %442 = vsyncadd %s432, %s441
          %s443 = sadd.s32 %s27, %s439
          %s444 = smul.addr %s28, 2
          %s445 = sadd.s32 %s443, %s444
          %s446 = smul.addr %s445, 128
          %s447 = scalar_lea.hbm %s4, %s446
          %s448 = sshll.u32 %s435, 4
          %s449 = int_to_ptr.vmem [resolvable:$true] %s448
          %454 = dma.vmem_to_hbm [thread:$0]  %s449, 256, %s447, %s432, 128, 128, 8
        $region52: #{tpu_custom_call.1} parent=35 // pred_fallthru
          _
      $region36: #{tpu_custom_call.1} parent=5 // pred_fallthru
        _
      %p455 = scmp.le.s32.totalorder 2, %s17
      // Predicated region
      $region53: #{tpu_custom_call.1} parent=5 // pred_check
        %p456 = pneg %p455
      $region54: #{tpu_custom_call.1} parent=5 // pred_check_branch
        %458 = sbr.rel (%p456) target = $region56
      $region55: #{tpu_custom_call.1} parent=5 // pred_region
        %s459 = ssub.s32 %s17, 2
        // Predicated region
        $region57: #{tpu_custom_call.1} parent=55 // pred_check
          %p460 = pneg %p177
        $region58: #{tpu_custom_call.1} parent=55 // pred_check_branch
          %462 = sbr.rel (%p460) target = $region60
        $region59: #{tpu_custom_call.1} parent=55 // pred_region
          %s463 = sand.u32 %s162, 1
          %s464 = scalar_lea.sflag [#allocation4], %s463
          %s465 = sand.u32 %s162, 1
          %s466 = smul.addr %s465, 16
          %s467 = scalar_lea.vmem [#allocation8], %s466
          %468 = dma.done %s464, 256
        $region60: #{tpu_custom_call.1} parent=55 // pred_fallthru
          _
      $region56: #{tpu_custom_call.1} parent=5 // pred_fallthru
        _
    $region6: #{tpu_custom_call.1} parent=1 // loop_footer
      %s21 = sadd.s32 1, %s17
    $region7: #{tpu_custom_call.1} parent=1 // loop_footer_branch
      %16 = sbr.rel target = $region3
    $region8: #{tpu_custom_call.1} parent=1 // loop_exit
      _
    %469 = vsyncpa [#allocation3], 1
    %s470 = scalar_lea.sflag [#allocation3], 1
    %471 = vsyncpa %s470, 1
    %472 = vsyncpa [#allocation6], 1
    %473 = vsyncpa [#allocation4], 1
    %s474 = scalar_lea.sflag [#allocation4], 1
    %475 = vsyncpa %s474, 1

// kernel: tpu_custom_call.1
$region0: #{tpu_custom_call.1}
  #allocation0 [shape = 'u32[]', space=smem, size = 0x4, offset = 0x4, fixed_abs, tag = 'smem constant byte address 0x4 - core index']
  #allocation1 [shape = 'u32[144,128]{1,0:T(1,128)}', space=vmem, size = 0x12000, scoped, tag = 'internal scratch']
  %s0 = inlined_call_operand.hbm [shape: f32[2,1,32], index: 0, kind: input, shape index: {}]
  %s1 = inlined_call_operand.vmem [shape: f32[2,1,32], index: 1, kind: input, shape index: {}]
  %s2 = inlined_call_operand.hbm [shape: f32[32,32], index: 2, kind: input, shape index: {}]
  %s3 = inlined_call_operand.hbm [shape: f32[2,16,32], index: 3, kind: input, shape index: {}]
  %s4 = inlined_call_operand.hbm [shape: f32[2,16,32], index: 4, kind: output, shape index: {}]
  %s5 = sld [smem:[#allocation0]]
  $region61: #{tpu_custom_call.1} parent=0
    _
  %s7 = ssub.s32 1, %s5
  %s8 = scalar_select 0, %s7, %s5
  $region1: #{tpu_custom_call.1} parent=0
    #allocation2 [shape = 'u8[1024]{0}', space=vmem, size = 0x400, scoped, tag = 'input window, operand 0']
    #allocation3 [shape = 's32[2]{0}', space=sflag, size = 0x8, scoped, tag = 'scoped memory for tpu_custom_call.1']
    #allocation4 [shape = 's32[2]{0}', space=sflag, size = 0x8, scoped, tag = 'scoped memory for tpu_custom_call.1']
    #allocation5 [shape = 'u8[16384]{0}', space=vmem, size = 0x4000, scoped, tag = 'input window, operand 2, single buffered']
    #allocation6 [shape = 's32[1]{0}', space=sflag, size = 0x4, scoped, tag = 'scoped memory for tpu_custom_call.1']
    #allocation7 [shape = 'u8[16384]{0}', space=vmem, size = 0x4000, scoped, tag = 'input window, operand 3']
    #allocation8 [shape = 'u8[16384]{0}', space=vmem, size = 0x4000, scoped, tag = 'output window, operand 0']
    %9 = vsyncpa [#allocation3], 0
    %s10 = scalar_lea.sflag [#allocation3], 1
    %11 = vsyncpa %s10, 0
    %12 = vsyncpa [#allocation6], 0
    %13 = vsyncpa [#allocation4], 0
    %s14 = scalar_lea.sflag [#allocation4], 1
    %15 = vsyncpa %s14, 0
    loop: start=0, step=1, limit=4
    $region2: #{tpu_custom_call.1} parent=1 // loop_pre_header
      _
    $region3: #{tpu_custom_call.1} parent=1 // loop_header
      %s17 = sphi 0, %s21
      %p18 = scmp.ge.s32.totalorder %s17, 4
      %s24 = sphi 0, %s43
      %s25 = sphi 0, %s39
      %s26 = sphi 0, %s35
      %s27 = sphi 0, %s24
      %s28 = sphi 0, %s25
      %s29 = sphi 0, %s26
      %s30 = sphi 0, %s27
      %s31 = sphi 0, %s28
      %s32 = sphi 0, %s29
      %s46 = sphi 0, %s48
      %s49 = sphi 0, %s46
      %s50 = sphi 0, %s49
      %s66 = sphi 0, %s50
      %s74 = sphi 0, %s76
      %s77 = sphi 0, %s74
      %s78 = sphi 0, %s77
      %s94 = sphi 0, %s78
      %s100 = sphi 0, %s102
      %s103 = sphi 0, %s100
      %s104 = sphi 0, %s103
      %s120 = sphi 0, %s104
      %s128 = sphi 0, %s130
      %s131 = sphi 0, %s128
      %s132 = sphi 0, %s131
      %s148 = sphi 0, %s132
      %s158 = sphi 0, %s160
      %s161 = sphi 0, %s158
      %s162 = sphi 0, %s161
      %s178 = sphi 0, %s162
    $region4: #{tpu_custom_call.1} parent=1 // loop_header_branch
      %20 = sbr.rel (%p18) target = $region8
    $region5: #{tpu_custom_call.1} parent=1 // loop_body
      %s22 = ssub.s32 %s17, 1
      %s23 = ssub.s32 %s17, 2
      %s33 = sadd.s32 1, %s26
      %p34 = scmp.ge.s32.totalorder %s33, 1
      %s35 = scalar_select %p34, 0, %s33
      %s36 = sadd.s32 1, %s25
      %s37 = scalar_select %p34, %s36, %s25
      %p38 = scmp.ge.s32.totalorder %s37, 2
      %s39 = scalar_select %p38, 0, %s37
      %s40 = sadd.s32 1, %s24
      %s41 = scalar_select %p38, %s40, %s24
      %p42 = scmp.ge.s32.totalorder %s41, 1
      %s43 = scalar_select %p42, 0, %s41
      %s44 = ssub.s32 %s25, %s39
      %p45 = scmp.eq.s32.totalorder %s44, 0
      %s47 = sadd.s32 %s46, 1
      %s48 = scalar_select %p45, %s46, %s47
      %p51 = pneg %p45
      %p52 = scmp.eq.s32.totalorder %s17, 1
      %p53 = por %p51, %p52
      %p54 = scmp.ne.s32.totalorder %s46, %s49
      %p55 = scmp.eq.s32.totalorder %s17, 0
      %p56 = por %p54, %p55
      %p57 = scmp.ne.s32.totalorder %s46, %s49
      %p58 = scmp.eq.s32.totalorder %s22, 1
      %p59 = por %p57, %p58
      %p60 = scmp.ne.s32.totalorder %s49, %s50
      %p61 = scmp.eq.s32.totalorder %s22, 0
      %p62 = por %p60, %p61
      %p63 = scmp.ne.s32.totalorder %s49, %s50
      %p64 = scmp.eq.s32.totalorder %s23, 1
      %p65 = por %p63, %p64
      %p67 = scmp.ne.s32.totalorder %s50, %s66
      %p68 = scmp.eq.s32.totalorder %s23, 0
      %p69 = por %p67, %p68
      %s70 = ssub.s32 %s25, %s39
      %s71 = ssub.s32 %s24, %s43
      %s72 = sor.u32 %s70, %s71
      %p73 = scmp.eq.s32.totalorder %s72, 0
      %s75 = sadd.s32 %s74, 1
      %s76 = scalar_select %p73, %s74, %s75
      %p79 = pneg %p73
      %p80 = scmp.eq.s32.totalorder %s17, 1
      %p81 = por %p79, %p80
      %p82 = scmp.ne.s32.totalorder %s74, %s77
      %p83 = scmp.eq.s32.totalorder %s17, 0
      %p84 = por %p82, %p83
      %p85 = scmp.ne.s32.totalorder %s74, %s77
      %p86 = scmp.eq.s32.totalorder %s22, 1
      %p87 = por %p85, %p86
      %p88 = scmp.ne.s32.totalorder %s77, %s78
      %p89 = scmp.eq.s32.totalorder %s22, 0
      %p90 = por %p88, %p89
      %p91 = scmp.ne.s32.totalorder %s77, %s78
      %p92 = scmp.eq.s32.totalorder %s23, 1
      %p93 = por %p91, %p92
      %p95 = scmp.ne.s32.totalorder %s78, %s94
      %p96 = scmp.eq.s32.totalorder %s23, 0
      %p97 = por %p95, %p96
      %s98 = ssub.s32 %s24, %s43
      %p99 = scmp.eq.s32.totalorder %s98, 0
      %s101 = sadd.s32 %s100, 1
      %s102 = scalar_select %p99, %s100, %s101
      %p105 = pneg %p99
      %p106 = scmp.eq.s32.totalorder %s17, 1
      %p107 = por %p105, %p106
      %p108 = scmp.ne.s32.totalorder %s100, %s103
      %p109 = scmp.eq.s32.totalorder %s17, 0
      %p110 = por %p108, %p109
      %p111 = scmp.ne.s32.totalorder %s100, %s103
      %p112 = scmp.eq.s32.totalorder %s22, 1
      %p113 = por %p111, %p112
      %p114 = scmp.ne.s32.totalorder %s103, %s104
      %p115 = scmp.eq.s32.totalorder %s22, 0
      %p116 = por %p114, %p115
      %p117 = scmp.ne.s32.totalorder %s103, %s104
      %p118 = scmp.eq.s32.totalorder %s23, 1
      %p119 = por %p117, %p118
      %p121 = scmp.ne.s32.totalorder %s104, %s120
      %p122 = scmp.eq.s32.totalorder %s23, 0
      %p123 = por %p121, %p122
      %s124 = ssub.s32 %s25, %s39
      %s125 = ssub.s32 %s26, %s35
      %s126 = sor.u32 %s124, %s125
      %p127 = scmp.eq.s32.totalorder %s126, 0
      %s129 = sadd.s32 %s128, 1
      %s130 = scalar_select %p127, %s128, %s129
      %p133 = pneg %p127
      %p134 = scmp.eq.s32.totalorder %s17, 1
      %p135 = por %p133, %p134
      %p136 = scmp.ne.s32.totalorder %s128, %s131
      %p137 = scmp.eq.s32.totalorder %s17, 0
      %p138 = por %p136, %p137
      %p139 = scmp.ne.s32.totalorder %s128, %s131
      %p140 = scmp.eq.s32.totalorder %s22, 1
      %p141 = por %p139, %p140
      %p142 = scmp.ne.s32.totalorder %s131, %s132
      %p143 = scmp.eq.s32.totalorder %s22, 0
      %p144 = por %p142, %p143
      %p145 = scmp.ne.s32.totalorder %s131, %s132
      %p146 = scmp.eq.s32.totalorder %s23, 1
      %p147 = por %p145, %p146
      %p149 = scmp.ne.s32.totalorder %s132, %s148
      %p150 = scmp.eq.s32.totalorder %s23, 0
      %p151 = por %p149, %p150
      %s152 = ssub.s32 %s25, %s39
      %s153 = ssub.s32 %s26, %s35
      %s154 = sor.u32 %s152, %s153
      %s155 = ssub.s32 %s24, %s43
      %s156 = sor.u32 %s154, %s155
      %p157 = scmp.eq.s32.totalorder %s156, 0
      %s159 = sadd.s32 %s158, 1
      %s160 = scalar_select %p157, %s158, %s159
      %p163 = pneg %p157
      %p164 = scmp.eq.s32.totalorder %s17, 1
      %p165 = por %p163, %p164
      %p166 = scmp.ne.s32.totalorder %s158, %s161
      %p167 = scmp.eq.s32.totalorder %s17, 0
      %p168 = por %p166, %p167
      %p169 = scmp.ne.s32.totalorder %s158, %s161
      %p170 = scmp.eq.s32.totalorder %s22, 1
      %p171 = por %p169, %p170
      %p172 = scmp.ne.s32.totalorder %s161, %s162
      %p173 = scmp.eq.s32.totalorder %s22, 0
      %p174 = por %p172, %p173
      %p175 = scmp.ne.s32.totalorder %s161, %s162
      %p176 = scmp.eq.s32.totalorder %s23, 1
      %p177 = por %p175, %p176
      %p179 = scmp.ne.s32.totalorder %s162, %s178
      %p180 = scmp.eq.s32.totalorder %s23, 0
      %p181 = por %p179, %p180
      %p182 = scmp.le.s32.totalorder 1, %s17
      %p183 = scmp.lt.s32.totalorder %s17, 3
      %p184 = pnand %p182, %p183
      %p185 = pneg %p184
      // Predicated region
      $region9: #{tpu_custom_call.1} parent=5 // pred_check
        _
      $region10: #{tpu_custom_call.1} parent=5 // pred_check_branch
        %187 = sbr.rel (%p184) target = $region12
      $region11: #{tpu_custom_call.1} parent=5 // pred_region
        %s188 = ssub.s32 %s17, 1
        // Predicated region
        $region13: #{tpu_custom_call.1} parent=11 // pred_check
          %p189 = pneg %p116
        $region14: #{tpu_custom_call.1} parent=11 // pred_check_branch
          %191 = sbr.rel (%p189) target = $region16
        $region15: #{tpu_custom_call.1} parent=11 // pred_region
          %s193 = ssub.s32 512, 512
          %194 = vsyncadd [#allocation6], %s193
          %s195 = smul.addr %s27, 128
          %s196 = scalar_lea.hbm %s2, %s195
          %s197 = sshll.u32 [#allocation5], 4
          %s198 = int_to_ptr.vmem [resolvable:$true] %s197
          %203 = dma.hbm_to_vmem [thread:$0]  %s196, 512, %s198, [#allocation6], 128, 128, 8
        $region16: #{tpu_custom_call.1} parent=11 // pred_fallthru
          _
      $region12: #{tpu_custom_call.1} parent=5 // pred_fallthru
        _
      %p204 = scmp.lt.s32.totalorder %s17, 2
      // Predicated region
      $region17: #{tpu_custom_call.1} parent=5 // pred_check
        %p205 = pneg %p204
      $region18: #{tpu_custom_call.1} parent=5 // pred_check_branch
        %207 = sbr.rel (%p205) target = $region20
      $region19: #{tpu_custom_call.1} parent=5 // pred_region
        // Predicated region
        $region21: #{tpu_custom_call.1} parent=19 // pred_check
          %p208 = pneg %p56
        $region22: #{tpu_custom_call.1} parent=19 // pred_check_branch
          %210 = sbr.rel (%p208) target = $region24
        $region23: #{tpu_custom_call.1} parent=19 // pred_region
          %s211 = sand.u32 %s17, 1
          %s212 = scalar_lea.sflag [#allocation3], %s211
          %s213 = sand.u32 %s46, 1
          %s214 = scalar_lea.vmem [#allocation2], %s213
          %s216 = ssub.s32 16, 16
          %217 = vsyncadd %s212, %s216
          %s218 = smul.addr %s25, 16
          %s219 = scalar_lea.hbm %s0, %s218
          %s221 = sshll.u32 %s214, 4
          %s222 = int_to_ptr.vmem [resolvable:$true] %s221
          %224 = dma.hbm_to_vmem [thread:$0]  %s219, 16, %s222, %s212
        $region24: #{tpu_custom_call.1} parent=19 // pred_fallthru
          _
        // Predicated region
        $region25: #{tpu_custom_call.1} parent=19 // pred_check
          %p225 = pneg %p84
        $region26: #{tpu_custom_call.1} parent=19 // pred_check_branch
          %227 = sbr.rel (%p225) target = $region28
        $region27: #{tpu_custom_call.1} parent=19 // pred_region
          %p228 = scmp.lt.s32.totalorder %s25, 1
          %s229 = scalar_select %p228, %s25, 1
          %p230 = scmp.lt.s32.totalorder %s24, 0
          %s231 = scalar_select %p230, %s24, 0
          %s232 = sadd.s32 %s231, %s229
          %s233 = scalar_lea.vmem %s1, %s232
        $region28: #{tpu_custom_call.1} parent=19 // pred_fallthru
          _
        // Predicated region
        $region29: #{tpu_custom_call.1} parent=19 // pred_check
          %p234 = pneg %p138
        $region30: #{tpu_custom_call.1} parent=19 // pred_check_branch
          %236 = sbr.rel (%p234) target = $region32
        $region31: #{tpu_custom_call.1} parent=19 // pred_region
          %s237 = sand.u32 %s17, 1
          %s238 = scalar_lea.sflag [#allocation3], %s237
          %s239 = sand.u32 %s128, 1
          %s240 = smul.addr %s239, 16
          %s241 = scalar_lea.vmem [#allocation7], %s240
          %s242 = smul.u32 2, %s26
          %s244 = ssub.s32 256, 256
          %245 = vsyncadd %s238, %s244
          %s246 = smul.addr %s25, 2
          %s247 = sadd.s32 %s242, %s246
          %s248 = smul.addr %s247, 128
          %s249 = scalar_lea.hbm %s3, %s248
          %s250 = sshll.u32 %s241, 4
          %s251 = int_to_ptr.vmem [resolvable:$true] %s250
          %256 = dma.hbm_to_vmem [thread:$0]  %s249, 256, %s251, %s238, 128, 128, 8
        $region32: #{tpu_custom_call.1} parent=19 // pred_fallthru
          _
      $region20: #{tpu_custom_call.1} parent=5 // pred_fallthru
        _
      %p257 = scmp.le.s32.totalorder 1, %s17
      %p258 = scmp.lt.s32.totalorder %s17, 3
      %p259 = pnand %p257, %p258
      %p260 = pneg %p259
      // Predicated region
      $region33: #{tpu_custom_call.1} parent=5 // pred_check
        _
      $region34: #{tpu_custom_call.1} parent=5 // pred_check_branch
        %262 = sbr.rel (%p259) target = $region36
      $region35: #{tpu_custom_call.1} parent=5 // pred_region
        %s263 = ssub.s32 %s17, 1
        %s264 = sand.u32 %s22, 1
        %s265 = scalar_lea.sflag [#allocation3], %s264
        %s266 = sand.u32 %s49, 1
        %s267 = scalar_lea.vmem [#allocation2], %s266
        // Predicated region
        $region37: #{tpu_custom_call.1} parent=35 // pred_check
          %p268 = pneg %p62
        $region38: #{tpu_custom_call.1} parent=35 // pred_check_branch
          %270 = sbr.rel (%p268) target = $region40
        $region39: #{tpu_custom_call.1} parent=35 // pred_region
          %271 = dma.done %s265, 16
        $region40: #{tpu_custom_call.1} parent=35 // pred_fallthru
          _
        // Predicated region
        $region41: #{tpu_custom_call.1} parent=35 // pred_check
          %p272 = pneg %p116
        $region42: #{tpu_custom_call.1} parent=35 // pred_check_branch
          %274 = sbr.rel (%p272) target = $region44
        $region43: #{tpu_custom_call.1} parent=35 // pred_region
          %275 = dma.done [#allocation6], 512
        $region44: #{tpu_custom_call.1} parent=35 // pred_fallthru
          _
        %s276 = sand.u32 %s22, 1
        %s277 = scalar_lea.sflag [#allocation3], %s276
        %s278 = sand.u32 %s131, 1
        %s279 = smul.addr %s278, 16
        %s280 = scalar_lea.vmem [#allocation7], %s279
        // Predicated region
        $region45: #{tpu_custom_call.1} parent=35 // pred_check
          %p281 = pneg %p144
        $region46: #{tpu_custom_call.1} parent=35 // pred_check_branch
          %283 = sbr.rel (%p281) target = $region48
        $region47: #{tpu_custom_call.1} parent=35 // pred_region
          %284 = dma.done %s277, 256
        $region48: #{tpu_custom_call.1} parent=35 // pred_fallthru
          _
        %s285 = sand.u32 %s22, 1
        %s286 = scalar_lea.sflag [#allocation3], %s285
        %s287 = sand.u32 %s49, 1
        %s288 = scalar_lea.vmem [#allocation2], %s287
        %p289 = pneg %p62
        %p290 = pneg %p59
        %p291 = scmp.lt.s32.totalorder %s28, 1
        %s292 = scalar_select %p291, %s28, 1
        %p293 = scmp.lt.s32.totalorder %s27, 0
        %s294 = scalar_select %p293, %s27, 0
        %s295 = sadd.s32 %s294, %s292
        %s296 = scalar_lea.vmem %s1, %s295
        %p297 = pneg %p90
        %p298 = pneg %p87
        %p299 = pneg %p116
        %p300 = pneg %p113
        %s301 = sand.u32 %s22, 1
        %s302 = scalar_lea.sflag [#allocation3], %s301
        %s303 = sand.u32 %s131, 1
        %s304 = smul.addr %s303, 16
        %s305 = scalar_lea.vmem [#allocation7], %s304
        %p306 = pneg %p144
        %p307 = pneg %p141
        %p308 = pneg %p174
        %p309 = pneg %p171
        %s310 = sand.u32 %s161, 1
        %s311 = scalar_lea.sflag [#allocation4], %s310
        %s312 = sand.u32 %s161, 1
        %s313 = smul.addr %s312, 16
        %s314 = scalar_lea.vmem [#allocation8], %s313
        %p315 = scmp.lt.s32.totalorder %s28, 1
        %s316 = scalar_select %p315, %s28, 1
        %p317 = scmp.lt.s32.totalorder %s27, 0
        %s318 = scalar_select %p317, %s27, 0
        %s319 = sadd.s32 %s318, %s316
        %s320 = scalar_lea.vmem %s1, %s319
        %s321 = smul.u32 2, %s29
        %s322 = smul.u32 2, %s29
        %v323 = vld [vmem:[%s280] sm:$0xff]
        %v324 = vld [vmem:[%s280 + $0x8] sm:$0xff]
        %v325 = vld [vmem:[%s267] sm:$0x1]
        %v327 = vlaneseq
        %v328 = vshrl.u32 %v327, 7
        %v329 = vsub.s32 0, %v328
        %v330 = vrot.slane %v325, %v329
        %v332 = vmul.f32 %v323, %v330
        %v333 = vmul.f32 %v324, %v330
        %v334 = vld [vmem:[#allocation5] sm:$0xff]
        %v335 = vld [vmem:[#allocation5 + $0x8] sm:$0xff]
        %v336 = vld [vmem:[#allocation5 + $0x10] sm:$0xff]
        %v337 = vld [vmem:[#allocation5 + $0x18] sm:$0xff]
        %vm338 = vcmask 261120
        %v340 = vsel %vm338, %v332, 0
        %v343 = vsel %vm338, %v333, 0
        %345 = vmatprep.subr.mxu0 0.0
        %346 = vmatpush1.msra.mxu0 %v334
        %347 = vmatprep.subr.mxu0 0.0
        %348 = vmatpush1.msra.mxu0 %v335
        %349 = vmatprep.subr.mxu0 0.0
        %350 = vmatpush1.msra.mxu0 %v336
        %351 = vmatprep.subr.mxu0 0.0
        %352 = vmatpush1.msra.mxu0 %v337
        %353 = vmatprep.subr.mxu0 0.0
        %354 = vmatpush1.msra.mxu0 0.0
        %355 = vmatprep.subr.mxu0 0.0
        %356 = vmatpush1.msra.mxu0 0.0
        %357 = vmatprep.subr.mxu0 0.0
        %358 = vmatpush1.msra.mxu0 0.0
        %359 = vmatprep.subr.mxu0 0.0
        %360 = vmatpush1.msra.mxu0 0.0
        %361 = vmatprep.subr.mxu0 0.0
        %362 = vmatpush1.msra.mxu0 0.0
        %363 = vmatprep.subr.mxu0 0.0
        %364 = vmatpush1.msra.mxu0 0.0
        %365 = vmatprep.subr.mxu0 0.0
        %366 = vmatpush1.msra.mxu0 0.0
        %367 = vmatprep.subr.mxu0 0.0
        %368 = vmatpush1.msra.mxu0 0.0
        %369 = vmatprep.subr.mxu0 0.0
        %370 = vmatpush1.msra.mxu0 0.0
        %371 = vmatprep.subr.mxu0 0.0
        %372 = vmatpush1.msra.mxu0 0.0
        %373 = vmatprep.subr.mxu0 0.0
        %374 = vmatpush1.msra.mxu0 0.0
        %375 = vmatprep.subr.mxu0 0.0
        %376 = vmatpush1.msra.mxu0 0.0
        %377 = vmatprep.subr.mxu0 0.0
        %378 = vmatpush1.msra.mxu0 0.0
        %379 = vmatprep.subr.mxu0 0.0
        %380 = vmatpush1.msra.mxu0 0.0
        %381 = vmatprep.subr.mxu0 0.0
        %382 = vmatpush1.msra.mxu0 0.0
        %383 = vmatprep.subr.mxu0 0.0
        %384 = vmatpush1.msra.mxu0 0.0
        %385 = vmatprep.subr.mxu0 0.0
        %386 = vmatpush1.msra.mxu0 0.0
        %387 = vmatprep.subr.mxu0 0.0
        %388 = vmatpush1.msra.mxu0 0.0
        %389 = vmatprep.subr.mxu0 0.0
        %390 = vmatpush1.msra.mxu0 0.0
        %391 = vmatprep.subr.mxu0 0.0
        %392 = vmatpush1.msra.mxu0 0.0
        %393 = vmatprep.subr.mxu0 0.0
        %394 = vmatpush1.msra.mxu0 0.0
        %395 = vmatprep.subr.mxu0 0.0
        %396 = vmatpush1.msra.mxu0 0.0
        %397 = vmatprep.subr.mxu0 0.0
        %398 = vmatpush1.msra.mxu0 0.0
        %399 = vmatprep.subr.mxu0 0.0
        %400 = vmatpush1.msra.mxu0 0.0
        %401 = vmatprep.subr.mxu0 0.0
        %402 = vmatpush1.msra.mxu0 0.0
        %403 = vmatprep.subr.mxu0 0.0
        %404 = vmatpush1.msra.mxu0 0.0
        %405 = vmatprep.subr.mxu0 0.0
        %406 = vmatpush1.msra.mxu0 0.0
        %407 = vmatprep.subr.mxu0 0.0
        %408 = vmatpush1.msra.mxu0 0.0
        %409 = vmatprep.mubr.f32.mxu0 0.0
        %410 = vmatmul.mubr.f32.gmra.mrb[0].mxu0 %v340
        %v411 = vpop.f32.mrb[0].mxu0
        %v412 = vadd.f32 0.0, %v411
        %v413 = vpop.f32.mrb[0].mxu0
        %414 = vmatprep.mubr.f32.mxu0 0.0
        %415 = vmatmul.mubr.f32.gmra.mrb[0].mxu0 %v343
        %v416 = vpop.f32.mrb[0].mxu0
        %v417 = vadd.f32 0.0, %v416
        %v418 = vpop.f32.mrb[0].mxu0
        %419 = vdwg.mxu0
        %v420 = vld [vmem:[%s320] sm:$0x1]
        %v422 = vlaneseq
        %v423 = vshrl.u32 %v422, 7
        %v424 = vsub.s32 0, %v423
        %v425 = vrot.slane %v420, %v424
        %v427 = vmul.f32 %v412, %v425
        %v428 = vmul.f32 %v417, %v425
        %429 = vst.msk [vmem:[%s314] sm:$0xff] %vm338, %v427
        %430 = vst.msk [vmem:[%s314 + $0x8] sm:$0xff] %vm338, %v428
        %s431 = sand.u32 %s161, 1
        %s432 = scalar_lea.sflag [#allocation4], %s431
        %s433 = sand.u32 %s161, 1
        %s434 = smul.addr %s433, 16
        %s435 = scalar_lea.vmem [#allocation8], %s434
        // Predicated region
        $region49: #{tpu_custom_call.1} parent=35 // pred_check
          %p436 = pneg %p171
        $region50: #{tpu_custom_call.1} parent=35 // pred_check_branch
          %438 = sbr.rel (%p436) target = $region52
        $region51: #{tpu_custom_call.1} parent=35 // pred_region
          %s439 = smul.u32 2, %s29
          %s441 = ssub.s32 256, 256
          %442 = vsyncadd %s432, %s441
          %s443 = sadd.s32 %s27, %s439
          %s444 = smul.addr %s28, 2
          %s445 = sadd.s32 %s443, %s444
          %s446 = smul.addr %s445, 128
          %s447 = scalar_lea.hbm %s4, %s446
          %s448 = sshll.u32 %s435, 4
          %s449 = int_to_ptr.vmem [resolvable:$true] %s448
          %454 = dma.vmem_to_hbm [thread:$0]  %s449, 256, %s447, %s432, 128, 128, 8
        $region52: #{tpu_custom_call.1} parent=35 // pred_fallthru
          _
      $region36: #{tpu_custom_call.1} parent=5 // pred_fallthru
        _
      %p455 = scmp.le.s32.totalorder 2, %s17
      // Predicated region
      $region53: #{tpu_custom_call.1} parent=5 // pred_check
        %p456 = pneg %p455
      $region54: #{tpu_custom_call.1} parent=5 // pred_check_branch
        %458 = sbr.rel (%p456) target = $region56
      $region55: #{tpu_custom_call.1} parent=5 // pred_region
        %s459 = ssub.s32 %s17, 2
        // Predicated region
        $region57: #{tpu_custom_call.1} parent=55 // pred_check
          %p460 = pneg %p177
        $region58: #{tpu_custom_call.1} parent=55 // pred_check_branch
          %462 = sbr.rel (%p460) target = $region60
        $region59: #{tpu_custom_call.1} parent=55 // pred_region
          %s463 = sand.u32 %s162, 1
          %s464 = scalar_lea.sflag [#allocation4], %s463
          %s465 = sand.u32 %s162, 1
          %s466 = smul.addr %s465, 16
          %s467 = scalar_lea.vmem [#allocation8], %s466
          %468 = dma.done %s464, 256
        $region60: #{tpu_custom_call.1} parent=55 // pred_fallthru
          _
      $region56: #{tpu_custom_call.1} parent=5 // pred_fallthru
        _
    $region6: #{tpu_custom_call.1} parent=1 // loop_footer
      %s21 = sadd.s32 1, %s17
    $region7: #{tpu_custom_call.1} parent=1 // loop_footer_branch
      %16 = sbr.rel target = $region3
    $region8: #{tpu_custom_call.1} parent=1 // loop_exit
      _
    %469 = vsyncpa [#allocation3], 1
    %s470 = scalar_lea.sflag [#allocation3], 1
    %471 = vsyncpa %s470, 1
    %472 = vsyncpa [#allocation6], 1
    %473 = vsyncpa [#allocation4], 1
    %s474 = scalar_lea.sflag [#allocation4], 1
    %475 = vsyncpa %s474, 1

</llo_original>
